<compile_context>
chip_gen: v5e
topology: v5e:2x2
jax: 0.10.0
libtpu: 0.0.40
codegen_flags: <defaults>
</compile_context>

<pallas_src>
import jax
import jax.numpy as jnp
from jax import lax
from jax.experimental import pallas as pl
from jax.experimental.pallas import tpu as pltpu


def embed_kernel(x_ref, w_ref, b_ref, o_ref):
    # x_ref: (B, tk) f32    w_ref: (N, tk) f32 (native Linear layout)
    # b_ref: (1, N)  f32    o_ref: (B, N)  f32 -- resident across the K grid axis
    k = pl.program_id(0)

    # partial = x_tile @ w_tile^T : contract the K dim of both operands,
    # f32 accumulate on the MXU.
    partial = lax.dot_general(
        x_ref[...],
        w_ref[...],
        dimension_numbers=(((1,), (1,)), ((), ())),
        preferred_element_type=jnp.float32,
    )

    @pl.when(k == 0)
    def _():
        o_ref[...] = partial            # first step: write (skip zero-init pass)

    @pl.when(k != 0)
    def _():
        o_ref[...] += partial           # accumulate directly into the resident output

    @pl.when(k == pl.num_programs(0) - 1)
    def _():
        y = o_ref[...] + b_ref[...]                       # bias add in f32
        sq_sum = jnp.sum(y * y, axis=1, keepdims=True)    # (B, 1) row norms^2
        o_ref[...] = (y * lax.rsqrt(sq_sum)).astype(o_ref.dtype)


# Explicit VMEM limit (safe on v7x's 64 MiB physical; unlocks large tiles on
# v5e/v6e whose scoped defaults are 16/32 MiB of 128 MiB physical).
_VMEM_LIMIT_BYTES = 48 * 1024 * 1024
# Tile-selection budget, kept below the limit for pipelining / internal slack.
_TILE_BUDGET_BYTES = 40 * 1024 * 1024


def _pick_tk(K, B, N, itemsize=4, budget_bytes=_TILE_BUDGET_BYTES):
    """Largest K tile that (a) divides K, (b) is lane-aligned (multiple of 128)
    unless it spans all of K, and (c) keeps double-buffered weight + x tiles
    plus the resident (B, N) output inside the VMEM budget."""
    per_tk = 2 * (N + B) * itemsize          # double-buffered weight + x tiles
    avail = budget_bytes - B * N * 4         # reserve the resident f32 output
    max_tk = max(128, avail // per_tk)
    if K <= max_tk:
        return K                             # single step: tile == full K dim
    best = None
    for tk in range(128, int(max_tk) + 1, 128):   # 128-aligned candidates
        if K % tk == 0:
            best = tk
    # Fallback (K has no suitable 128-multiple divisor): one monolithic step.
    return best if best is not None else K


def embed_forward(x, weight, bias):
    """x: (B, C, H, W) or (B, dim_in). weight: (dim_out, dim_in). bias: (dim_out,)."""
    B = x.shape[0]
    x2 = x.reshape(B, -1).astype(jnp.float32)     # same as torch's x.view(B, -1)
    K = x2.shape[1]
    N = weight.shape[0]

    w = weight.astype(jnp.float32)                # native (N, K) layout, no transpose
    b2 = bias.reshape(1, N).astype(jnp.float32)

    tk = _pick_tk(K, B, N)
    grid = (K // tk,)

    cost = pl.CostEstimate(
        flops=2 * B * K * N,
        transcendentals=B,  # one rsqrt per row
        bytes_accessed=B * K * 4 + N * K * 4 + N * 4 + B * N * 4,
    )

    return pl.pallas_call(
        embed_kernel,
        out_shape=jax.ShapeDtypeStruct((B, N), jnp.float32),
        grid_spec=pltpu.PrefetchScalarGridSpec(
            num_scalar_prefetch=0,
            grid=grid,
            in_specs=[
                pl.BlockSpec((B, tk), lambda k: (0, k)),   # x tile over K
                pl.BlockSpec((N, tk), lambda k: (0, k)),   # weight tile over K
                pl.BlockSpec((1, N), lambda k: (0, 0)),    # bias (whole)
            ],
            # Same block index for every k -> output stays resident in VMEM
            # across the reduction axis and doubles as the accumulator.
            out_specs=pl.BlockSpec((B, N), lambda k: (0, 0)),
        ),
        compiler_params=pltpu.CompilerParams(
            dimension_semantics=("arbitrary",),            # K is a reduction axis
            vmem_limit_bytes=_VMEM_LIMIT_BYTES,
        ),
        cost_estimate=cost,
    )(x2, w, b2)


if __name__ == "__main__":
    # Shapes consistent with the module: B=2, C=4, H=W=16 -> dim_in=1024, dim_out=128
    B, C, H, W = 2, 4, 16, 16
    dim_in = C * H * W      # 1024
    dim_out = 128

    key = jax.random.PRNGKey(0)
    kx, kw, kb = jax.random.split(key, 3)

    x = jax.random.normal(kx, (B, C, H, W), dtype=jnp.float32)

    # Deterministic parameter init mimicking nn.Linear default:
    # uniform(-1/sqrt(dim_in), 1/sqrt(dim_in))
    bound = 1.0 / jnp.sqrt(jnp.float32(dim_in))
    weight = jax.random.uniform(kw, (dim_out, dim_in), jnp.float32, -bound, bound)
    bias = jax.random.uniform(kb, (dim_out,), jnp.float32, -bound, bound)

    out = embed_forward(x, weight, bias)
    out = jax.block_until_ready(out)

    # Reference check in plain JAX (same math as the PyTorch module, f32).
    ref_y = x.reshape(B, -1) @ weight.T + bias
    ref = ref_y / jnp.sqrt(jnp.sum(ref_y * ref_y, axis=1, keepdims=True))
    assert out.shape == (B, dim_out)
    assert jnp.allclose(out, ref, atol=2e-3, rtol=2e-3), (
        float(jnp.max(jnp.abs(out - ref))))
    # Rows must be unit-norm (normalization happens in f32 inside the kernel).
    assert jnp.allclose(jnp.linalg.norm(out, axis=1), 1.0, atol=1e-4)

    print("KERNEL_OK")
</pallas_src>

<mosaic_0001>
module attributes {stable_mosaic.version = 11 : i64} {
  func.func @embed_kernel(%arg0: i32, %arg1: memref<2x1024xf32, #tpu.memory_space<vmem>>, %arg2: memref<128x1024xf32, #tpu.memory_space<vmem>>, %arg3: memref<1x128xf32, #tpu.memory_space<vmem>>, %arg4: memref<2x128xf32, #tpu.memory_space<vmem>>) attributes {dimension_semantics = [#tpu.dimension_semantics<arbitrary>], iteration_bounds = array<i64: 1>, scalar_prefetch = 0 : i64, scratch_operands = 0 : i64, tpu.core_type = #tpu.core_type<tc>, window_params = [{transform_indices = @transform_0, window_bounds = array<i64: 2, 1024>}, {transform_indices = @transform_1, window_bounds = array<i64: 128, 1024>}, {pipeline_mode = #tpu.pipeline_mode<synchronous>, transform_indices = @transform_2, window_bounds = array<i64: 1, 128>}, {pipeline_mode = #tpu.pipeline_mode<synchronous>, transform_indices = @transform_3, window_bounds = array<i64: 2, 128>}]} {
    %c0 = arith.constant 0 : index
    %c0_0 = arith.constant 0 : index
    %0 = vector.load %arg1[%c0, %c0_0] : memref<2x1024xf32, #tpu.memory_space<vmem>>, vector<2x1024xf32>
    %c0_1 = arith.constant 0 : index
    %c0_2 = arith.constant 0 : index
    %1 = vector.load %arg2[%c0_1, %c0_2] : memref<128x1024xf32, #tpu.memory_space<vmem>>, vector<128x1024xf32>
    %cst = arith.constant dense<0.000000e+00> : vector<2x128xf32>
    %2 = tpu.matmul %0, %1, %cst {dimension_numbers = #tpu.dot_dimension_numbers<[1], [1], [0], [0], [0, 0, 1, 0], [], []>} : vector<2x1024xf32>, vector<128x1024xf32>, vector<2x128xf32> -> vector<2x128xf32>
    %c0_i32 = arith.constant 0 : i32
    %3 = arith.cmpi eq, %arg0, %c0_i32 : i32
    %4 = arith.extui %3 : i1 to i32
    %c0_i32_3 = arith.constant 0 : i32
    %5 = arith.cmpi ne, %4, %c0_i32_3 : i32
    scf.if %5 {
      %c0_8 = arith.constant 0 : index
      %c0_9 = arith.constant 0 : index
      %12 = vector.load %arg4[%c0_8, %c0_9] : memref<2x128xf32, #tpu.memory_space<vmem>>, vector<2x128xf32>
      tpu.vector_store %arg4[%c0_8, %c0_9], %2 {strides = array<i32>} : memref<2x128xf32, #tpu.memory_space<vmem>>, vector<2x128xf32>,
    } else {
    }
    %c0_i32_4 = arith.constant 0 : i32
    %6 = arith.cmpi ne, %arg0, %c0_i32_4 : i32
    %7 = arith.extui %6 : i1 to i32
    %c0_i32_5 = arith.constant 0 : i32
    %8 = arith.cmpi ne, %7, %c0_i32_5 : i32
    scf.if %8 {
      %c0_8 = arith.constant 0 : index
      %c0_9 = arith.constant 0 : index
      %12 = vector.load %arg4[%c0_8, %c0_9] : memref<2x128xf32, #tpu.memory_space<vmem>>, vector<2x128xf32>
      %13 = arith.addf %12, %2 : vector<2x128xf32>
      %c0_10 = arith.constant 0 : index
      %c0_11 = arith.constant 0 : index
      %14 = vector.load %arg4[%c0_10, %c0_11] : memref<2x128xf32, #tpu.memory_space<vmem>>, vector<2x128xf32>
      tpu.vector_store %arg4[%c0_10, %c0_11], %13 {strides = array<i32>} : memref<2x128xf32, #tpu.memory_space<vmem>>, vector<2x128xf32>,
    } else {
    }
    %c0_i32_6 = arith.constant 0 : i32
    %9 = arith.cmpi eq, %arg0, %c0_i32_6 : i32
    %10 = arith.extui %9 : i1 to i32
    %c0_i32_7 = arith.constant 0 : i32
    %11 = arith.cmpi ne, %10, %c0_i32_7 : i32
    scf.if %11 {
      %c0_8 = arith.constant 0 : index
      %c0_9 = arith.constant 0 : index
      %12 = vector.load %arg4[%c0_8, %c0_9] : memref<2x128xf32, #tpu.memory_space<vmem>>, vector<2x128xf32>
      %c0_10 = arith.constant 0 : index
      %c0_11 = arith.constant 0 : index
      %13 = vector.load %arg3[%c0_10, %c0_11] : memref<1x128xf32, #tpu.memory_space<vmem>>, vector<1x128xf32>
      %14 = vector.broadcast %13 : vector<1x128xf32> to vector<2x128xf32>
      %15 = arith.addf %12, %14 : vector<2x128xf32>
      %16 = arith.mulf %15, %15 : vector<2x128xf32>
      %cst_12 = arith.constant dense<0.000000e+00> : vector<2xf32>
      %17 = vector.multi_reduction <add>, %16, %cst_12 [1] : vector<2x128xf32> to vector<2xf32>
      %18 = vector.shape_cast %17 : vector<2xf32> to vector<2x1xf32>
      %19 = math.rsqrt %18 : vector<2x1xf32>
      %20 = vector.broadcast %19 : vector<2x1xf32> to vector<2x128xf32>
      %21 = arith.mulf %15, %20 : vector<2x128xf32>
      %c0_13 = arith.constant 0 : index
      %c0_14 = arith.constant 0 : index
      %22 = vector.load %arg4[%c0_13, %c0_14] : memref<2x128xf32, #tpu.memory_space<vmem>>, vector<2x128xf32>
      tpu.vector_store %arg4[%c0_13, %c0_14], %21 {strides = array<i32>} : memref<2x128xf32, #tpu.memory_space<vmem>>, vector<2x128xf32>,
    } else {
    }
    return
  }
  func.func @transform_0(%arg0: i32) -> (i32, i32) {
    %c0_i32 = arith.constant 0 : i32
    %c0_i32_0 = arith.constant 0 : i32
    return %c0_i32, %arg0 : i32, i32
  }
  func.func @transform_1(%arg0: i32) -> (i32, i32) {
    %c0_i32 = arith.constant 0 : i32
    %c0_i32_0 = arith.constant 0 : i32
    return %c0_i32, %arg0 : i32, i32
  }
  func.func @transform_2(%arg0: i32) -> (i32, i32) {
    %c0_i32 = arith.constant 0 : i32
    %c0_i32_0 = arith.constant 0 : i32
    %c0_i32_1 = arith.constant 0 : i32
    return %c0_i32, %c0_i32_0 : i32, i32
  }
  func.func @transform_3(%arg0: i32) -> (i32, i32) {
    %c0_i32 = arith.constant 0 : i32
    %c0_i32_0 = arith.constant 0 : i32
    %c0_i32_1 = arith.constant 0 : i32
    return %c0_i32, %c0_i32_0 : i32, i32
  }
}

</mosaic_0001>

<llo_original>
// kernel: tpu_custom_call.1
$region0: #{tpu_custom_call.1}
  #allocation0 [shape = 'u32[]', space=smem, size = 0x4, offset = 0x4, fixed_abs, tag = 'smem constant byte address 0x4 - core index']
  #allocation1 [shape = 'u32[72,128]{1,0:T(1,128)}', space=vmem, size = 0x9000, scoped, tag = 'internal scratch']
  %s0 = inlined_call_operand.hbm [shape: f32[2,1024], index: 0, kind: input, shape index: {}]
  %s1 = inlined_call_operand.hbm [shape: f32[128,1024], index: 1, kind: input, shape index: {}]
  %s2 = inlined_call_operand.vmem [shape: f32[1,128], index: 2, kind: input, shape index: {}]
  %s3 = inlined_call_operand.hbm [shape: f32[2,128], index: 3, kind: output, shape index: {}]
  %s4 = sld [smem:[#allocation0]]
  $region42: #{tpu_custom_call.1} parent=0
    _
  %s6 = ssub.s32 1, %s4
  %s7 = scalar_select 0, %s6, %s4
  $region1: #{tpu_custom_call.1} parent=0
    #allocation2 [shape = 'u8[8192]{0}', space=vmem, size = 0x2000, scoped, tag = 'input window, operand 0, single buffered']
    #allocation3 [shape = 's32[1]{0}', space=sflag, size = 0x4, scoped, tag = 'scoped memory for tpu_custom_call.1']
    #allocation4 [shape = 's32[1]{0}', space=sflag, size = 0x4, scoped, tag = 'scoped memory for tpu_custom_call.1']
    #allocation5 [shape = 'u8[524288]{0}', space=vmem, size = 0x80000, scoped, tag = 'input window, operand 1, single buffered']
    #allocation6 [shape = 's32[1]{0}', space=sflag, size = 0x4, scoped, tag = 'scoped memory for tpu_custom_call.1']
    #allocation7 [shape = 'u8[1024]{0}', space=vmem, size = 0x400, scoped, tag = 'output window, operand 0, single buffered']
    %8 = vsyncpa [#allocation3], 0
    %9 = vsyncpa [#allocation6], 0
    %10 = vsyncpa [#allocation4], 0
    // Predicated region
    $region2: #{tpu_custom_call.1} parent=1 // pred_check
      _
    $region3: #{tpu_custom_call.1} parent=1 // pred_check_branch
      %12 = sbr.rel (0) target = $region5
    $region4: #{tpu_custom_call.1} parent=1 // pred_region
      %14 = vsyncadd [#allocation3], 0
      %s16 = sshll.u32 %s0, 4
      %s17 = int_to_ptr.hbm [resolvable:$true] %s16
      %s18 = sshll.u32 [#allocation2], 4
      %s19 = int_to_ptr.vmem [resolvable:$true] %s18
      %21 = dma.hbm_to_vmem [thread:$0]  %s17, 256, %s19, [#allocation3]
    $region5: #{tpu_custom_call.1} parent=1 // pred_fallthru
      _
    // Predicated region
    $region6: #{tpu_custom_call.1} parent=1 // pred_check
      _
    $region7: #{tpu_custom_call.1} parent=1 // pred_check_branch
      %23 = sbr.rel (0) target = $region9
    $region8: #{tpu_custom_call.1} parent=1 // pred_region
      %25 = vsyncadd [#allocation6], 0
      %s26 = sshll.u32 %s1, 4
      %s27 = int_to_ptr.hbm [resolvable:$true] %s26
      %s28 = sshll.u32 [#allocation5], 4
      %s29 = int_to_ptr.vmem [resolvable:$true] %s28
      %34 = dma.hbm_to_vmem [thread:$0]  %s27, 16384, %s29, [#allocation6], 1024, 1024, 64
    $region9: #{tpu_custom_call.1} parent=1 // pred_fallthru
      _
    // Predicated region
    $region10: #{tpu_custom_call.1} parent=1 // pred_check
      _
    $region11: #{tpu_custom_call.1} parent=1 // pred_check_branch
      %36 = sbr.rel (0) target = $region13
    $region12: #{tpu_custom_call.1} parent=1 // pred_region
      _
    $region13: #{tpu_custom_call.1} parent=1 // pred_fallthru
      _
    // Predicated region
    $region14: #{tpu_custom_call.1} parent=1 // pred_check
      _
    $region15: #{tpu_custom_call.1} parent=1 // pred_check_branch
      %38 = sbr.rel (0) target = $region17
    $region16: #{tpu_custom_call.1} parent=1 // pred_region
      %40 = dma.done [#allocation3], 256
    $region17: #{tpu_custom_call.1} parent=1 // pred_fallthru
      _
    // Predicated region
    $region18: #{tpu_custom_call.1} parent=1 // pred_check
      _
    $region19: #{tpu_custom_call.1} parent=1 // pred_check_branch
      %42 = sbr.rel (0) target = $region21
    $region20: #{tpu_custom_call.1} parent=1 // pred_region
      %44 = dma.done [#allocation6], 16384
    $region21: #{tpu_custom_call.1} parent=1 // pred_fallthru
      _
    %v45 = vld [vmem:[#allocation2] sm:$0xff]
    %v46 = vld [vmem:[#allocation2 + $0x8] sm:$0xff]
    %v47 = vld [vmem:[#allocation5] sm:$0xff]
    %v48 = vld [vmem:[#allocation5 + $0x8] sm:$0xff]
    %v49 = vld [vmem:[#allocation5 + $0x10] sm:$0xff]
    %v50 = vld [vmem:[#allocation5 + $0x18] sm:$0xff]
    %v51 = vld [vmem:[#allocation5 + $0x20] sm:$0xff]
    %v52 = vld [vmem:[#allocation5 + $0x28] sm:$0xff]
    %v53 = vld [vmem:[#allocation5 + $0x30] sm:$0xff]
    %v54 = vld [vmem:[#allocation5 + $0x38] sm:$0xff]
    %v55 = vld [vmem:[#allocation5 + $0x40] sm:$0xff]
    %v56 = vld [vmem:[#allocation5 + $0x48] sm:$0xff]
    %v57 = vld [vmem:[#allocation5 + $0x50] sm:$0xff]
    %v58 = vld [vmem:[#allocation5 + $0x58] sm:$0xff]
    %v59 = vld [vmem:[#allocation5 + $0x60] sm:$0xff]
    %v60 = vld [vmem:[#allocation5 + $0x68] sm:$0xff]
    %v61 = vld [vmem:[#allocation5 + $0x70] sm:$0xff]
    %v62 = vld [vmem:[#allocation5 + $0x78] sm:$0xff]
    %v63 = vld [vmem:[#allocation5 + $0x80] sm:$0xff]
    %v64 = vld [vmem:[#allocation5 + $0x88] sm:$0xff]
    %v65 = vld [vmem:[#allocation5 + $0x90] sm:$0xff]
    %v66 = vld [vmem:[#allocation5 + $0x98] sm:$0xff]
    %v67 = vld [vmem:[#allocation5 + $0xa0] sm:$0xff]
    %v68 = vld [vmem:[#allocation5 + $0xa8] sm:$0xff]
    %v69 = vld [vmem:[#allocation5 + $0xb0] sm:$0xff]
    %v70 = vld [vmem:[#allocation5 + $0xb8] sm:$0xff]
    %v71 = vld [vmem:[#allocation5 + $0xc0] sm:$0xff]
    %v72 = vld [vmem:[#allocation5 + $0xc8] sm:$0xff]
    %v73 = vld [vmem:[#allocation5 + $0xd0] sm:$0xff]
    %v74 = vld [vmem:[#allocation5 + $0xd8] sm:$0xff]
    %v75 = vld [vmem:[#allocation5 + $0xe0] sm:$0xff]
    %v76 = vld [vmem:[#allocation5 + $0xe8] sm:$0xff]
    %v77 = vld [vmem:[#allocation5 + $0xf0] sm:$0xff]
    %v78 = vld [vmem:[#allocation5 + $0xf8] sm:$0xff]
    %v79 = vld [vmem:[#allocation5 + $0x100] sm:$0xff]
    %v80 = vld [vmem:[#allocation5 + $0x108] sm:$0xff]
    %v81 = vld [vmem:[#allocation5 + $0x110] sm:$0xff]
    %v82 = vld [vmem:[#allocation5 + $0x118] sm:$0xff]
    %v83 = vld [vmem:[#allocation5 + $0x120] sm:$0xff]
    %v84 = vld [vmem:[#allocation5 + $0x128] sm:$0xff]
    %v85 = vld [vmem:[#allocation5 + $0x130] sm:$0xff]
    %v86 = vld [vmem:[#allocation5 + $0x138] sm:$0xff]
    %v87 = vld [vmem:[#allocation5 + $0x140] sm:$0xff]
    %v88 = vld [vmem:[#allocation5 + $0x148] sm:$0xff]
    %v89 = vld [vmem:[#allocation5 + $0x150] sm:$0xff]
    %v90 = vld [vmem:[#allocation5 + $0x158] sm:$0xff]
    %v91 = vld [vmem:[#allocation5 + $0x160] sm:$0xff]
    %v92 = vld [vmem:[#allocation5 + $0x168] sm:$0xff]
    %v93 = vld [vmem:[#allocation5 + $0x170] sm:$0xff]
    %v94 = vld [vmem:[#allocation5 + $0x178] sm:$0xff]
    %v95 = vld [vmem:[#allocation5 + $0x180] sm:$0xff]
    %v96 = vld [vmem:[#allocation5 + $0x188] sm:$0xff]
    %v97 = vld [vmem:[#allocation5 + $0x190] sm:$0xff]
    %v98 = vld [vmem:[#allocation5 + $0x198] sm:$0xff]
    %v99 = vld [vmem:[#allocation5 + $0x1a0] sm:$0xff]
    %v100 = vld [vmem:[#allocation5 + $0x1a8] sm:$0xff]
    %v101 = vld [vmem:[#allocation5 + $0x1b0] sm:$0xff]
    %v102 = vld [vmem:[#allocation5 + $0x1b8] sm:$0xff]
    %v103 = vld [vmem:[#allocation5 + $0x1c0] sm:$0xff]
    %v104 = vld [vmem:[#allocation5 + $0x1c8] sm:$0xff]
    %v105 = vld [vmem:[#allocation5 + $0x1d0] sm:$0xff]
    %v106 = vld [vmem:[#allocation5 + $0x1d8] sm:$0xff]
    %v107 = vld [vmem:[#allocation5 + $0x1e0] sm:$0xff]
    %v108 = vld [vmem:[#allocation5 + $0x1e8] sm:$0xff]
    %v109 = vld [vmem:[#allocation5 + $0x1f0] sm:$0xff]
    %v110 = vld [vmem:[#allocation5 + $0x1f8] sm:$0xff]
    %v111 = vld [vmem:[#allocation5 + $0x200] sm:$0xff]
    %v112 = vld [vmem:[#allocation5 + $0x208] sm:$0xff]
    %v113 = vld [vmem:[#allocation5 + $0x210] sm:$0xff]
    %v114 = vld [vmem:[#allocation5 + $0x218] sm:$0xff]
    %v115 = vld [vmem:[#allocation5 + $0x220] sm:$0xff]
    %v116 = vld [vmem:[#allocation5 + $0x228] sm:$0xff]
    %v117 = vld [vmem:[#allocation5 + $0x230] sm:$0xff]
    %v118 = vld [vmem:[#allocation5 + $0x238] sm:$0xff]
    %v119 = vld [vmem:[#allocation5 + $0x240] sm:$0xff]
    %v120 = vld [vmem:[#allocation5 + $0x248] sm:$0xff]
    %v121 = vld [vmem:[#allocation5 + $0x250] sm:$0xff]
    %v122 = vld [vmem:[#allocation5 + $0x258] sm:$0xff]
    %v123 = vld [vmem:[#allocation5 + $0x260] sm:$0xff]
    %v124 = vld [vmem:[#allocation5 + $0x268] sm:$0xff]
    %v125 = vld [vmem:[#allocation5 + $0x270] sm:$0xff]
    %v126 = vld [vmem:[#allocation5 + $0x278] sm:$0xff]
    %v127 = vld [vmem:[#allocation5 + $0x280] sm:$0xff]
    %v128 = vld [vmem:[#allocation5 + $0x288] sm:$0xff]
    %v129 = vld [vmem:[#allocation5 + $0x290] sm:$0xff]
    %v130 = vld [vmem:[#allocation5 + $0x298] sm:$0xff]
    %v131 = vld [vmem:[#allocation5 + $0x2a0] sm:$0xff]
    %v132 = vld [vmem:[#allocation5 + $0x2a8] sm:$0xff]
    %v133 = vld [vmem:[#allocation5 + $0x2b0] sm:$0xff]
    %v134 = vld [vmem:[#allocation5 + $0x2b8] sm:$0xff]
    %v135 = vld [vmem:[#allocation5 + $0x2c0] sm:$0xff]
    %v136 = vld [vmem:[#allocation5 + $0x2c8] sm:$0xff]
    %v137 = vld [vmem:[#allocation5 + $0x2d0] sm:$0xff]
    %v138 = vld [vmem:[#allocation5 + $0x2d8] sm:$0xff]
    %v139 = vld [vmem:[#allocation5 + $0x2e0] sm:$0xff]
    %v140 = vld [vmem:[#allocation5 + $0x2e8] sm:$0xff]
    %v141 = vld [vmem:[#allocation5 + $0x2f0] sm:$0xff]
    %v142 = vld [vmem:[#allocation5 + $0x2f8] sm:$0xff]
    %v143 = vld [vmem:[#allocation5 + $0x300] sm:$0xff]
    %v144 = vld [vmem:[#allocation5 + $0x308] sm:$0xff]
    %v145 = vld [vmem:[#allocation5 + $0x310] sm:$0xff]
    %v146 = vld [vmem:[#allocation5 + $0x318] sm:$0xff]
    %v147 = vld [vmem:[#allocation5 + $0x320] sm:$0xff]
    %v148 = vld [vmem:[#allocation5 + $0x328] sm:$0xff]
    %v149 = vld [vmem:[#allocation5 + $0x330] sm:$0xff]
    %v150 = vld [vmem:[#allocation5 + $0x338] sm:$0xff]
    %v151 = vld [vmem:[#allocation5 + $0x340] sm:$0xff]
    %v152 = vld [vmem:[#allocation5 + $0x348] sm:$0xff]
    %v153 = vld [vmem:[#allocation5 + $0x350] sm:$0xff]
    %v154 = vld [vmem:[#allocation5 + $0x358] sm:$0xff]
    %v155 = vld [vmem:[#allocation5 + $0x360] sm:$0xff]
    %v156 = vld [vmem:[#allocation5 + $0x368] sm:$0xff]
    %v157 = vld [vmem:[#allocation5 + $0x370] sm:$0xff]
    %v158 = vld [vmem:[#allocation5 + $0x378] sm:$0xff]
    %v159 = vld [vmem:[#allocation5 + $0x380] sm:$0xff]
    %v160 = vld [vmem:[#allocation5 + $0x388] sm:$0xff]
    %v161 = vld [vmem:[#allocation5 + $0x390] sm:$0xff]
    %v162 = vld [vmem:[#allocation5 + $0x398] sm:$0xff]
    %v163 = vld [vmem:[#allocation5 + $0x3a0] sm:$0xff]
    %v164 = vld [vmem:[#allocation5 + $0x3a8] sm:$0xff]
    %v165 = vld [vmem:[#allocation5 + $0x3b0] sm:$0xff]
    %v166 = vld [vmem:[#allocation5 + $0x3b8] sm:$0xff]
    %v167 = vld [vmem:[#allocation5 + $0x3c0] sm:$0xff]
    %v168 = vld [vmem:[#allocation5 + $0x3c8] sm:$0xff]
    %v169 = vld [vmem:[#allocation5 + $0x3d0] sm:$0xff]
    %v170 = vld [vmem:[#allocation5 + $0x3d8] sm:$0xff]
    %v171 = vld [vmem:[#allocation5 + $0x3e0] sm:$0xff]
    %v172 = vld [vmem:[#allocation5 + $0x3e8] sm:$0xff]
    %v173 = vld [vmem:[#allocation5 + $0x3f0] sm:$0xff]
    %v174 = vld [vmem:[#allocation5 + $0x3f8] sm:$0xff]
    %177 = vst [vmem:[#allocation1] ss:$4 sm:$0xff] %v45
    %s178 = scalar_lea.vmem [#allocation1], 32
    %179 = vst [vmem:[%s178] ss:$4 sm:$0xff] %v46
    %v180 = vld.sshfl [vmem:[#allocation1] sm:$0xff pattern:$0x73625140]
    %v181 = vld.sshfl [vmem:[#allocation1 + $0x8] sm:$0xff pattern:$0x73625140]
    %v182 = vld.sshfl [vmem:[#allocation1 + $0x10] sm:$0xff pattern:$0x73625140]
    %v183 = vld.sshfl [vmem:[#allocation1 + $0x18] sm:$0xff pattern:$0x73625140]
    %v184 = vld.sshfl [vmem:[#allocation1 + $0x20] sm:$0xff pattern:$0x73625140]
    %v185 = vld.sshfl [vmem:[#allocation1 + $0x28] sm:$0xff pattern:$0x73625140]
    %v186 = vld.sshfl [vmem:[#allocation1 + $0x30] sm:$0xff pattern:$0x73625140]
    %v187 = vld.sshfl [vmem:[#allocation1 + $0x38] sm:$0xff pattern:$0x73625140]
    %196 = vmatpush.xpose.msra.mxu0 %v167
    %197 = vmatpush.xpose.msra.mxu0 %v159
    %198 = vmatpush.xpose.msra.mxu0 %v151
    %199 = vmatpush.xpose.msra.mxu0 %v143
    %200 = vmatpush.xpose.msra.mxu0 %v135
    %201 = vmatpush.xpose.msra.mxu0 %v127
    %202 = vmatpush.xpose.msra.mxu0 %v119
    %203 = vmatpush.xpose.msra.mxu0 %v111
    %204 = vmatpush.xpose.msra.mxu0 %v103
    %205 = vmatpush.xpose.msra.mxu0 %v95
    %206 = vmatpush.xpose.msra.mxu0 %v87
    %207 = vmatpush.xpose.msra.mxu0 %v79
    %208 = vmatpush.xpose.msra.mxu0 %v71
    %209 = vmatpush.xpose.msra.mxu0 %v63
    %210 = vmatpush.xpose.msra.mxu0 %v55
    %211 = vmatpush.xpose.msra.mxu0 %v47
    %212 = vmatmul.f32.gmra.mxu0 %v180
    %v213 = vpop.f32.mrf.mxu0
    %v214 = vadd.f32 0.0, %v213
    %215 = vdwg.mxu0
    %216 = vmatpush.xpose.msra.mxu0 %v168
    %217 = vmatpush.xpose.msra.mxu0 %v160
    %218 = vmatpush.xpose.msra.mxu0 %v152
    %219 = vmatpush.xpose.msra.mxu0 %v144
    %220 = vmatpush.xpose.msra.mxu0 %v136
    %221 = vmatpush.xpose.msra.mxu0 %v128
    %222 = vmatpush.xpose.msra.mxu0 %v120
    %223 = vmatpush.xpose.msra.mxu0 %v112
    %224 = vmatpush.xpose.msra.mxu0 %v104
    %225 = vmatpush.xpose.msra.mxu0 %v96
    %226 = vmatpush.xpose.msra.mxu0 %v88
    %227 = vmatpush.xpose.msra.mxu0 %v80
    %228 = vmatpush.xpose.msra.mxu0 %v72
    %229 = vmatpush.xpose.msra.mxu0 %v64
    %230 = vmatpush.xpose.msra.mxu0 %v56
    %231 = vmatpush.xpose.msra.mxu0 %v48
    %232 = vmatmul.f32.gmra.mxu0 %v181
    %v233 = vpop.f32.mrf.mxu0
    %v234 = vadd.f32 %v214, %v233
    %235 = vdwg.mxu0
    %236 = vmatpush.xpose.msra.mxu0 %v169
    %237 = vmatpush.xpose.msra.mxu0 %v161
    %238 = vmatpush.xpose.msra.mxu0 %v153
    %239 = vmatpush.xpose.msra.mxu0 %v145
    %240 = vmatpush.xpose.msra.mxu0 %v137
    %241 = vmatpush.xpose.msra.mxu0 %v129
    %242 = vmatpush.xpose.msra.mxu0 %v121
    %243 = vmatpush.xpose.msra.mxu0 %v113
    %244 = vmatpush.xpose.msra.mxu0 %v105
    %245 = vmatpush.xpose.msra.mxu0 %v97
    %246 = vmatpush.xpose.msra.mxu0 %v89
    %247 = vmatpush.xpose.msra.mxu0 %v81
    %248 = vmatpush.xpose.msra.mxu0 %v73
    %249 = vmatpush.xpose.msra.mxu0 %v65
    %250 = vmatpush.xpose.msra.mxu0 %v57
    %251 = vmatpush.xpose.msra.mxu0 %v49
    %252 = vmatmul.f32.gmra.mxu0 %v182
    %v253 = vpop.f32.mrf.mxu0
    %v254 = vadd.f32 %v234, %v253
    %255 = vdwg.mxu0
    %256 = vmatpush.xpose.msra.mxu0 %v170
    %257 = vmatpush.xpose.msra.mxu0 %v162
    %258 = vmatpush.xpose.msra.mxu0 %v154
    %259 = vmatpush.xpose.msra.mxu0 %v146
    %260 = vmatpush.xpose.msra.mxu0 %v138
    %261 = vmatpush.xpose.msra.mxu0 %v130
    %262 = vmatpush.xpose.msra.mxu0 %v122
    %263 = vmatpush.xpose.msra.mxu0 %v114
    %264 = vmatpush.xpose.msra.mxu0 %v106
    %265 = vmatpush.xpose.msra.mxu0 %v98
    %266 = vmatpush.xpose.msra.mxu0 %v90
    %267 = vmatpush.xpose.msra.mxu0 %v82
    %268 = vmatpush.xpose.msra.mxu0 %v74
    %269 = vmatpush.xpose.msra.mxu0 %v66
    %270 = vmatpush.xpose.msra.mxu0 %v58
    %271 = vmatpush.xpose.msra.mxu0 %v50
    %272 = vmatmul.f32.gmra.mxu0 %v183
    %v273 = vpop.f32.mrf.mxu0
    %v274 = vadd.f32 %v254, %v273
    %275 = vdwg.mxu0
    %276 = vmatpush.xpose.msra.mxu0 %v171
    %277 = vmatpush.xpose.msra.mxu0 %v163
    %278 = vmatpush.xpose.msra.mxu0 %v155
    %279 = vmatpush.xpose.msra.mxu0 %v147
    %280 = vmatpush.xpose.msra.mxu0 %v139
    %281 = vmatpush.xpose.msra.mxu0 %v131
    %282 = vmatpush.xpose.msra.mxu0 %v123
    %283 = vmatpush.xpose.msra.mxu0 %v115
    %284 = vmatpush.xpose.msra.mxu0 %v107
    %285 = vmatpush.xpose.msra.mxu0 %v99
    %286 = vmatpush.xpose.msra.mxu0 %v91
    %287 = vmatpush.xpose.msra.mxu0 %v83
    %288 = vmatpush.xpose.msra.mxu0 %v75
    %289 = vmatpush.xpose.msra.mxu0 %v67
    %290 = vmatpush.xpose.msra.mxu0 %v59
    %291 = vmatpush.xpose.msra.mxu0 %v51
    %292 = vmatmul.f32.gmra.mxu0 %v184
    %v293 = vpop.f32.mrf.mxu0
    %v294 = vadd.f32 %v274, %v293
    %295 = vdwg.mxu0
    %296 = vmatpush.xpose.msra.mxu0 %v172
    %297 = vmatpush.xpose.msra.mxu0 %v164
    %298 = vmatpush.xpose.msra.mxu0 %v156
    %299 = vmatpush.xpose.msra.mxu0 %v148
    %300 = vmatpush.xpose.msra.mxu0 %v140
    %301 = vmatpush.xpose.msra.mxu0 %v132
    %302 = vmatpush.xpose.msra.mxu0 %v124
    %303 = vmatpush.xpose.msra.mxu0 %v116
    %304 = vmatpush.xpose.msra.mxu0 %v108
    %305 = vmatpush.xpose.msra.mxu0 %v100
    %306 = vmatpush.xpose.msra.mxu0 %v92
    %307 = vmatpush.xpose.msra.mxu0 %v84
    %308 = vmatpush.xpose.msra.mxu0 %v76
    %309 = vmatpush.xpose.msra.mxu0 %v68
    %310 = vmatpush.xpose.msra.mxu0 %v60
    %311 = vmatpush.xpose.msra.mxu0 %v52
    %312 = vmatmul.f32.gmra.mxu0 %v185
    %v313 = vpop.f32.mrf.mxu0
    %v314 = vadd.f32 %v294, %v313
    %315 = vdwg.mxu0
    %316 = vmatpush.xpose.msra.mxu0 %v173
    %317 = vmatpush.xpose.msra.mxu0 %v165
    %318 = vmatpush.xpose.msra.mxu0 %v157
    %319 = vmatpush.xpose.msra.mxu0 %v149
    %320 = vmatpush.xpose.msra.mxu0 %v141
    %321 = vmatpush.xpose.msra.mxu0 %v133
    %322 = vmatpush.xpose.msra.mxu0 %v125
    %323 = vmatpush.xpose.msra.mxu0 %v117
    %324 = vmatpush.xpose.msra.mxu0 %v109
    %325 = vmatpush.xpose.msra.mxu0 %v101
    %326 = vmatpush.xpose.msra.mxu0 %v93
    %327 = vmatpush.xpose.msra.mxu0 %v85
    %328 = vmatpush.xpose.msra.mxu0 %v77
    %329 = vmatpush.xpose.msra.mxu0 %v69
    %330 = vmatpush.xpose.msra.mxu0 %v61
    %331 = vmatpush.xpose.msra.mxu0 %v53
    %332 = vmatmul.f32.gmra.mxu0 %v186
    %v333 = vpop.f32.mrf.mxu0
    %v334 = vadd.f32 %v314, %v333
    %335 = vdwg.mxu0
    %336 = vmatpush.xpose.msra.mxu0 %v174
    %337 = vmatpush.xpose.msra.mxu0 %v166
    %338 = vmatpush.xpose.msra.mxu0 %v158
    %339 = vmatpush.xpose.msra.mxu0 %v150
    %340 = vmatpush.xpose.msra.mxu0 %v142
    %341 = vmatpush.xpose.msra.mxu0 %v134
    %342 = vmatpush.xpose.msra.mxu0 %v126
    %343 = vmatpush.xpose.msra.mxu0 %v118
    %344 = vmatpush.xpose.msra.mxu0 %v110
    %345 = vmatpush.xpose.msra.mxu0 %v102
    %346 = vmatpush.xpose.msra.mxu0 %v94
    %347 = vmatpush.xpose.msra.mxu0 %v86
    %348 = vmatpush.xpose.msra.mxu0 %v78
    %349 = vmatpush.xpose.msra.mxu0 %v70
    %350 = vmatpush.xpose.msra.mxu0 %v62
    %351 = vmatpush.xpose.msra.mxu0 %v54
    %352 = vmatmul.f32.gmra.mxu0 %v187
    %v353 = vpop.f32.mrf.mxu0
    %v354 = vadd.f32 %v334, %v353
    %355 = vdwg.mxu0
    %p356 = scmp.eq.s32.totalorder 0, 0
    // Predicated region
    $region22: #{tpu_custom_call.1} parent=1 // pred_check
      %p357 = pneg %p356
    $region23: #{tpu_custom_call.1} parent=1 // pred_check_branch
      %359 = sbr.rel (%p357) target = $region25
    $region24: #{tpu_custom_call.1} parent=1 // pred_region
      %360 = vst [vmem:[#allocation7] sm:$0x3] %v354
    $region25: #{tpu_custom_call.1} parent=1 // pred_fallthru
      _
    %p361 = scmp.ne.s32.totalorder 0, 0
    // Predicated region
    $region26: #{tpu_custom_call.1} parent=1 // pred_check
      %p362 = pneg %p361
    $region27: #{tpu_custom_call.1} parent=1 // pred_check_branch
      %364 = sbr.rel (%p362) target = $region29
    $region28: #{tpu_custom_call.1} parent=1 // pred_region
      %v365 = vld [vmem:[#allocation7] sm:$0x3]
      %v366 = vadd.f32 %v365, %v354
      %367 = vst [vmem:[#allocation7] sm:$0x3] %v366
    $region29: #{tpu_custom_call.1} parent=1 // pred_fallthru
      _
    // Predicated region
    $region30: #{tpu_custom_call.1} parent=1 // pred_check
      %p368 = pneg %p356
    $region31: #{tpu_custom_call.1} parent=1 // pred_check_branch
      %370 = sbr.rel (%p368) target = $region33
    $region32: #{tpu_custom_call.1} parent=1 // pred_region
      %v371 = vld [vmem:[#allocation7] sm:$0x3]
      %v372 = vld [vmem:[%s2] sm:$0x1]
      %v374 = vperm.slane %v372, 0
      %v376 = vadd.f32 %v371, %v374
      %v377 = vmul.f32 %v376, %v376
      %vm378 = vcmask 1041408
      %v379 = vsel %vm378, %v377, 0.0
      %380 = vadd.xlane.f32.xlu0 %v379
      %v381 = vpop.xlane.xlu0 %380
      %v382 = vrsqrt.pop %v381
      %v383 = vmul.f32 %v382, %v381
      %v384 = vmul.f32 %v383, %v382
      %v385 = vmul.f32 0.5, %v384
      %v386 = vsub.f32 1.5, %v385
      %v387 = vmul.f32 %v382, %v386
      %vm388 = vweird.f32 %v381
      %vm389 = vweird.f32 %v382
      %vm390 = vmor %vm388, %vm389
      %v391 = vsel %vm390, %v382, %v387
      %v392 = vmul.f32 %v376, %v391
      %393 = vst [vmem:[#allocation7] sm:$0x3] %v392
    $region33: #{tpu_custom_call.1} parent=1 // pred_fallthru
      _
    // Predicated region
    $region34: #{tpu_custom_call.1} parent=1 // pred_check
      _
    $region35: #{tpu_custom_call.1} parent=1 // pred_check_branch
      %395 = sbr.rel (0) target = $region37
    $region36: #{tpu_custom_call.1} parent=1 // pred_region
      %397 = vsyncadd [#allocation4], 0
      %s399 = sshll.u32 [#allocation7], 4
      %s400 = int_to_ptr.vmem [resolvable:$true] %s399
      %s401 = sshll.u32 %s3, 4
      %s402 = int_to_ptr.hbm [resolvable:$true] %s401
      %404 = dma.vmem_to_hbm [thread:$0]  %s400, 32, %s402, [#allocation4]
    $region37: #{tpu_custom_call.1} parent=1 // pred_fallthru
      _
    // Predicated region
    $region38: #{tpu_custom_call.1} parent=1 // pred_check
      _
    $region39: #{tpu_custom_call.1} parent=1 // pred_check_branch
      %406 = sbr.rel (0) target = $region41
    $region40: #{tpu_custom_call.1} parent=1 // pred_region
      %408 = dma.done [#allocation4], 32
    $region41: #{tpu_custom_call.1} parent=1 // pred_fallthru
      _
    %409 = vsyncpa [#allocation3], 1
    %410 = vsyncpa [#allocation6], 1
    %411 = vsyncpa [#allocation4], 1

</llo_original>
